<compile_context>
chip_gen: v7x
topology: tpu7x:2x2x1
jax: 0.10.0
libtpu: 0.0.40
codegen_flags: <defaults>
</compile_context>

<pallas_src>
import math

import jax
import jax.numpy as jnp
from jax.experimental import pallas as pl
from jax.experimental.pallas import tpu as pltpu

# Scaled-down, lane-dense dims (real model: input_dim=1280, hidden_dim=512,
# both multiples of 128, so the same structure applies unchanged).
BATCH = 4
SEQ = 8
INPUT_DIM = 128
HIDDEN_DIM = 128
BATCH_BLOCK = 2     # sequences per grid step


def decoder_kernel(x_ref, w1_ref, b1_ref, w2_ref, b2_ref,
                   wa_ref, w3_ref, b3_ref, w4_ref,
                   ba_ref, b4_ref, out_ref):
    bb, L, din = x_ref.shape
    H = w1_ref.shape[1]
    cdt = w1_ref.dtype        # MXU operand dtype (bf16 in production, f32 in test)

    # Fold the batch block into rows so the MXU sees one (Bb*L, Din) matmul.
    x = x_ref[...].reshape(bb * L, din).astype(cdt)

    # dense_1 + relu : (Bb*L, Din) @ (Din, H), f32 accumulate, f32 bias/relu.
    h1 = jnp.dot(x, w1_ref[...], preferred_element_type=jnp.float32)
    h1 = jnp.maximum(h1 + b1_ref[...], 0.0)                          # (Bb*L, H) f32

    # dense_2 + relu : (Bb*L, H) @ (H, H)
    h2 = jnp.dot(h1.astype(cdt), w2_ref[...], preferred_element_type=jnp.float32)
    h2 = jnp.maximum(h2 + b2_ref[...], 0.0)                          # (Bb*L, H) f32

    h2_3d = h2.reshape(bb, L, H)

    # Attention1d: Conv1d(H, 1, k=1) == Linear(H -> 1) over features.
    # An N=1 matvec wastes the MXU, so do a VPU multiply + lane reduce.
    logits = jnp.sum(h2_3d * wa_ref[...][None], axis=-1, keepdims=True) + ba_ref[0, 0]
    m = jnp.max(logits, axis=1, keepdims=True)                       # softmax over L
    e = jnp.exp(logits - m)
    attn = e / jnp.sum(e, axis=1, keepdims=True)                     # (Bb, L, 1)
    pooled = jnp.sum(attn * h2_3d, axis=1)                           # (Bb, H)

    # dense_3 + relu : (Bb, H) @ (H, H)
    h3 = jnp.dot(pooled.astype(cdt), w3_ref[...], preferred_element_type=jnp.float32)
    h3 = jnp.maximum(h3 + b3_ref[...], 0.0)                          # (Bb, H) f32

    # dense_4 : H -> 1, again as a VPU reduce.
    y = jnp.sum(h3 * w4_ref[...], axis=-1, keepdims=True) + b4_ref[0, 0]   # (Bb, 1)
    out_ref[...] = y.reshape(out_ref.shape).astype(out_ref.dtype)


def decoder_forward(x, kp, *, batch_block=BATCH_BLOCK):
    """x: (B, L, Din) ESM layer-33 representations (bf16 for production, f32 ok)."""
    B, L, Din = x.shape
    H = kp["w1t"].shape[1]
    assert B % batch_block == 0, "toy wrapper assumes B % batch_block == 0"
    Bb = batch_block

    def const_spec(shape):
        # VMEM-resident weight: constant index map (never re-fetched), and
        # single-buffered so the second pipeline buffer isn't dead VMEM.
        return pl.BlockSpec(shape, lambda g: (0, 0), pipeline_mode=pl.Buffered(1))

    smem = pl.BlockSpec(memory_space=pltpu.MemorySpace.SMEM)

    out = pl.pallas_call(
        decoder_kernel,
        out_shape=jax.ShapeDtypeStruct((B, 1, 1), jnp.float32),
        grid=(B // Bb,),
        in_specs=[
            # x: streamed per batch block, default double-buffering.
            # (On v6e, raise to pl.Buffered(3) only if xprof shows exposed DMA.)
            pl.BlockSpec((Bb, L, Din), lambda g: (g, 0, 0)),
            const_spec((Din, H)),                             # w1t (compute dtype)
            const_spec((1, H)),                               # b1  (f32)
            const_spec((H, H)),                               # w2t
            const_spec((1, H)),                               # b2
            const_spec((1, H)),                               # wa row (f32, VPU)
            const_spec((H, H)),                               # w3t
            const_spec((1, H)),                               # b3
            const_spec((1, H)),                               # w4 row (f32, VPU)
            smem,                                             # ba scalar
            smem,                                             # b4 scalar
        ],
        out_specs=pl.BlockSpec((Bb, 1, 1), lambda g: (g, 0, 0)),
        compiler_params=pltpu.CompilerParams(
            dimension_semantics=("parallel",),
            # Above the scoped defaults (16/32 MiB) but under v7x's 64 MiB
            # physical VMEM; plenty for bf16 real-dim blocks at Bb<=2.
            vmem_limit_bytes=48 * 1024 * 1024,
        ),
    )(x,
      kp["w1t"], kp["b1"],
      kp["w2t"], kp["b2"],
      kp["wa"],
      kp["w3t"], kp["b3"],
      kp["w4"],
      kp["ba"], kp["b4"])
    return out.reshape(B, 1)


def decoder_reference(x, p):
    h1 = jnp.maximum(jnp.einsum("bld,hd->blh", x, p["w1"]) + p["b1"], 0.0)
    h2 = jnp.maximum(jnp.einsum("blh,gh->blg", h1, p["w2"]) + p["b2"], 0.0)
    logits = jnp.einsum("blh,h->bl", h2, p["wa"][0]) + p["ba"][0]
    attn = jax.nn.softmax(logits, axis=-1)
    pooled = jnp.einsum("bl,blh->bh", attn, h2)
    h3 = jnp.maximum(pooled @ p["w3"].T + p["b3"], 0.0)
    return h3 @ p["w4"].T + p["b4"]


def init_linear(key, out_dim, in_dim):
    # PyTorch nn.Linear / nn.Conv1d default: U(-1/sqrt(fan_in), 1/sqrt(fan_in))
    kw, kb = jax.random.split(key)
    bound = 1.0 / math.sqrt(in_dim)
    w = jax.random.uniform(kw, (out_dim, in_dim), jnp.float32, -bound, bound)
    b = jax.random.uniform(kb, (out_dim,), jnp.float32, -bound, bound)
    return w, b


def init_params(key):
    k1, k2, ka, k3, k4 = jax.random.split(key, 5)
    w1, b1 = init_linear(k1, HIDDEN_DIM, INPUT_DIM)
    w2, b2 = init_linear(k2, HIDDEN_DIM, HIDDEN_DIM)
    wa, ba = init_linear(ka, 1, HIDDEN_DIM)          # Attention1d conv1d(k=1): H -> 1
    w3, b3 = init_linear(k3, HIDDEN_DIM, HIDDEN_DIM)
    w4, b4 = init_linear(k4, 1, HIDDEN_DIM)
    return dict(w1=w1, b1=b1, w2=w2, b2=b2, wa=wa, ba=ba,
                w3=w3, b3=b3, w4=w4, b4=b4)


def prepare_params(p, compute_dtype=jnp.bfloat16):
    # One-time host-side layout prep: (out, in) -> (in, out) so every in-kernel
    # matmul is the canonical MXU contraction (no in-kernel transposes).
    # Only the MXU operands (w1t, w2t, w3t) are cast to the compute dtype;
    # biases and the two H->1 rows stay f32 (they live on the f32 VPU path —
    # v5e has no bf16 VPU, and they are tiny).
    return dict(
        w1t=p["w1"].T.astype(compute_dtype), b1=p["b1"].reshape(1, -1),
        w2t=p["w2"].T.astype(compute_dtype), b2=p["b2"].reshape(1, -1),
        wa=p["wa"].reshape(1, -1), ba=p["ba"].reshape(1, 1),
        w3t=p["w3"].T.astype(compute_dtype), b3=p["b3"].reshape(1, -1),
        w4=p["w4"].reshape(1, -1), b4=p["b4"].reshape(1, 1),
    )


if __name__ == "__main__":
    key = jax.random.PRNGKey(0)
    kx, kparams = jax.random.split(key)
    # x stands in for the ESM-1b layer-33 representations: (B, L, D_in).
    x = jax.random.normal(kx, (BATCH, SEQ, INPUT_DIM), jnp.float32)
    params = init_params(kparams)
    ref = decoder_reference(x, params)

    # f32 path: exact check of the kernel mechanics against the reference.
    out_f32 = decoder_forward(x, prepare_params(params, jnp.float32))
    out_f32 = jax.block_until_ready(out_f32)
    assert out_f32.shape == (BATCH, 1)
    assert jnp.allclose(out_f32, ref, atol=1e-5, rtol=1e-5)

    # bf16 production path: bf16 x-stream + bf16 MXU operands, f32 accumulate.
    out_bf16 = decoder_forward(x.astype(jnp.bfloat16),
                               prepare_params(params, jnp.bfloat16))
    out_bf16 = jax.block_until_ready(out_bf16)
    assert out_bf16.shape == (BATCH, 1)
    assert jnp.allclose(out_bf16, ref, atol=5e-2, rtol=5e-2)

    print("KERNEL_OK")
</pallas_src>

<mosaic_0001>
module attributes {stable_mosaic.version = 11 : i64} {
  func.func @decoder_kernel(%arg0: i32, %arg1: memref<2x8x128xf32, #tpu.memory_space<vmem>>, %arg2: memref<128x128xf32, #tpu.memory_space<vmem>>, %arg3: memref<1x128xf32, #tpu.memory_space<vmem>>, %arg4: memref<128x128xf32, #tpu.memory_space<vmem>>, %arg5: memref<1x128xf32, #tpu.memory_space<vmem>>, %arg6: memref<1x128xf32, #tpu.memory_space<vmem>>, %arg7: memref<128x128xf32, #tpu.memory_space<vmem>>, %arg8: memref<1x128xf32, #tpu.memory_space<vmem>>, %arg9: memref<1x128xf32, #tpu.memory_space<vmem>>, %arg10: memref<1x1xf32, #tpu.memory_space<smem>>, %arg11: memref<1x1xf32, #tpu.memory_space<smem>>, %arg12: memref<2x1x1xf32, #tpu.memory_space<vmem>>) attributes {dimension_semantics = [#tpu.dimension_semantics<parallel>], iteration_bounds = array<i64: 2>, scalar_prefetch = 0 : i64, scratch_operands = 0 : i64, tpu.core_type = #tpu.core_type<tc>, window_params = [{transform_indices = @transform_0, window_bounds = array<i64: 2, 8, 128>}, {pipeline_mode = #tpu.pipeline_mode<synchronous>, transform_indices = @transform_1, window_bounds = array<i64: 128, 128>}, {pipeline_mode = #tpu.pipeline_mode<synchronous>, transform_indices = @transform_2, window_bounds = array<i64: 1, 128>}, {pipeline_mode = #tpu.pipeline_mode<synchronous>, transform_indices = @transform_3, window_bounds = array<i64: 128, 128>}, {pipeline_mode = #tpu.pipeline_mode<synchronous>, transform_indices = @transform_4, window_bounds = array<i64: 1, 128>}, {pipeline_mode = #tpu.pipeline_mode<synchronous>, transform_indices = @transform_5, window_bounds = array<i64: 1, 128>}, {pipeline_mode = #tpu.pipeline_mode<synchronous>, transform_indices = @transform_6, window_bounds = array<i64: 128, 128>}, {pipeline_mode = #tpu.pipeline_mode<synchronous>, transform_indices = @transform_7, window_bounds = array<i64: 1, 128>}, {pipeline_mode = #tpu.pipeline_mode<synchronous>, transform_indices = @transform_8, window_bounds = array<i64: 1, 128>}, {transform_indices = @transform_9, window_bounds = array<i64: 1, 1>}, {transform_indices = @transform_10, window_bounds = array<i64: 1, 1>}, {transform_indices = @transform_11, window_bounds = array<i64: 2, 1, 1>}]} {
    %c0 = arith.constant 0 : index
    %c0_0 = arith.constant 0 : index
    %c0_1 = arith.constant 0 : index
    %0 = vector.load %arg1[%c0, %c0_0, %c0_1] : memref<2x8x128xf32, #tpu.memory_space<vmem>>, vector<2x8x128xf32>
    %1 = vector.shape_cast %0 : vector<2x8x128xf32> to vector<16x128xf32>
    %c0_2 = arith.constant 0 : index
    %c0_3 = arith.constant 0 : index
    %2 = vector.load %arg2[%c0_2, %c0_3] : memref<128x128xf32, #tpu.memory_space<vmem>>, vector<128x128xf32>
    %cst = arith.constant dense<0.000000e+00> : vector<16x128xf32>
    %3 = tpu.matmul %1, %2, %cst {dimension_numbers = #tpu.dot_dimension_numbers<[1], [0], [0], [1], [0, 0, 1, 1], [], []>} : vector<16x128xf32>, vector<128x128xf32>, vector<16x128xf32> -> vector<16x128xf32>
    %c0_4 = arith.constant 0 : index
    %c0_5 = arith.constant 0 : index
    %4 = vector.load %arg3[%c0_4, %c0_5] : memref<1x128xf32, #tpu.memory_space<vmem>>, vector<1x128xf32>
    %5 = vector.broadcast %4 : vector<1x128xf32> to vector<16x128xf32>
    %6 = arith.addf %3, %5 : vector<16x128xf32>
    %cst_6 = arith.constant 0.000000e+00 : f32
    %7 = vector.broadcast %cst_6 : f32 to vector<16x128xf32>
    %8 = arith.maximumf %6, %7 : vector<16x128xf32>
    %c0_7 = arith.constant 0 : index
    %c0_8 = arith.constant 0 : index
    %9 = vector.load %arg4[%c0_7, %c0_8] : memref<128x128xf32, #tpu.memory_space<vmem>>, vector<128x128xf32>
    %cst_9 = arith.constant dense<0.000000e+00> : vector<16x128xf32>
    %10 = tpu.matmul %8, %9, %cst_9 {dimension_numbers = #tpu.dot_dimension_numbers<[1], [0], [0], [1], [0, 0, 1, 1], [], []>} : vector<16x128xf32>, vector<128x128xf32>, vector<16x128xf32> -> vector<16x128xf32>
    %c0_10 = arith.constant 0 : index
    %c0_11 = arith.constant 0 : index
    %11 = vector.load %arg5[%c0_10, %c0_11] : memref<1x128xf32, #tpu.memory_space<vmem>>, vector<1x128xf32>
    %12 = vector.broadcast %11 : vector<1x128xf32> to vector<16x128xf32>
    %13 = arith.addf %10, %12 : vector<16x128xf32>
    %cst_12 = arith.constant 0.000000e+00 : f32
    %14 = vector.broadcast %cst_12 : f32 to vector<16x128xf32>
    %15 = arith.maximumf %13, %14 : vector<16x128xf32>
    %16 = vector.shape_cast %15 : vector<16x128xf32> to vector<2x8x128xf32>
    %c0_13 = arith.constant 0 : index
    %c0_14 = arith.constant 0 : index
    %17 = vector.load %arg6[%c0_13, %c0_14] : memref<1x128xf32, #tpu.memory_space<vmem>>, vector<1x128xf32>
    %18 = vector.shape_cast %17 : vector<1x128xf32> to vector<1x1x128xf32>
    %19 = vector.broadcast %18 : vector<1x1x128xf32> to vector<2x8x128xf32>
    %20 = arith.mulf %16, %19 : vector<2x8x128xf32>
    %cst_15 = arith.constant dense<0.000000e+00> : vector<2x8xf32>
    %21 = vector.multi_reduction <add>, %20, %cst_15 [2] : vector<2x8x128xf32> to vector<2x8xf32>
    %22 = vector.shape_cast %21 : vector<2x8xf32> to vector<2x8x1xf32>
    %c0_16 = arith.constant 0 : index
    %c0_17 = arith.constant 0 : index
    %23 = memref.load %arg10[%c0_16, %c0_17] : memref<1x1xf32, #tpu.memory_space<smem>>
    %24 = vector.broadcast %23 : f32 to vector<2x8x1xf32>
    %25 = arith.addf %22, %24 : vector<2x8x1xf32>
    %cst_18 = arith.constant dense<0xFF800000> : vector<2x1xf32>
    %26 = vector.multi_reduction <maximumf>, %25, %cst_18 [1] : vector<2x8x1xf32> to vector<2x1xf32>
    %27 = vector.shape_cast %26 : vector<2x1xf32> to vector<2x1x1xf32>
    %28 = vector.broadcast %27 : vector<2x1x1xf32> to vector<2x8x1xf32>
    %29 = arith.subf %25, %28 : vector<2x8x1xf32>
    %30 = math.exp %29 : vector<2x8x1xf32>
    %cst_19 = arith.constant dense<0.000000e+00> : vector<2x1xf32>
    %31 = vector.multi_reduction <add>, %30, %cst_19 [1] : vector<2x8x1xf32> to vector<2x1xf32>
    %32 = vector.shape_cast %31 : vector<2x1xf32> to vector<2x1x1xf32>
    %33 = vector.broadcast %32 : vector<2x1x1xf32> to vector<2x8x1xf32>
    %34 = arith.divf %30, %33 : vector<2x8x1xf32>
    %35 = vector.broadcast %34 : vector<2x8x1xf32> to vector<2x8x128xf32>
    %36 = arith.mulf %35, %16 : vector<2x8x128xf32>
    %cst_20 = arith.constant dense<0.000000e+00> : vector<2x128xf32>
    %37 = vector.multi_reduction <add>, %36, %cst_20 [1] : vector<2x8x128xf32> to vector<2x128xf32>
    %c0_21 = arith.constant 0 : index
    %c0_22 = arith.constant 0 : index
    %38 = vector.load %arg7[%c0_21, %c0_22] : memref<128x128xf32, #tpu.memory_space<vmem>>, vector<128x128xf32>
    %cst_23 = arith.constant dense<0.000000e+00> : vector<2x128xf32>
    %39 = tpu.matmul %37, %38, %cst_23 {dimension_numbers = #tpu.dot_dimension_numbers<[1], [0], [0], [1], [0, 0, 1, 1], [], []>} : vector<2x128xf32>, vector<128x128xf32>, vector<2x128xf32> -> vector<2x128xf32>
    %c0_24 = arith.constant 0 : index
    %c0_25 = arith.constant 0 : index
    %40 = vector.load %arg8[%c0_24, %c0_25] : memref<1x128xf32, #tpu.memory_space<vmem>>, vector<1x128xf32>
    %41 = vector.broadcast %40 : vector<1x128xf32> to vector<2x128xf32>
    %42 = arith.addf %39, %41 : vector<2x128xf32>
    %cst_26 = arith.constant 0.000000e+00 : f32
    %43 = vector.broadcast %cst_26 : f32 to vector<2x128xf32>
    %44 = arith.maximumf %42, %43 : vector<2x128xf32>
    %c0_27 = arith.constant 0 : index
    %c0_28 = arith.constant 0 : index
    %45 = vector.load %arg9[%c0_27, %c0_28] : memref<1x128xf32, #tpu.memory_space<vmem>>, vector<1x128xf32>
    %46 = vector.broadcast %45 : vector<1x128xf32> to vector<2x128xf32>
    %47 = arith.mulf %44, %46 : vector<2x128xf32>
    %cst_29 = arith.constant dense<0.000000e+00> : vector<2xf32>
    %48 = vector.multi_reduction <add>, %47, %cst_29 [1] : vector<2x128xf32> to vector<2xf32>
    %49 = vector.shape_cast %48 : vector<2xf32> to vector<2x1xf32>
    %c0_30 = arith.constant 0 : index
    %c0_31 = arith.constant 0 : index
    %50 = memref.load %arg11[%c0_30, %c0_31] : memref<1x1xf32, #tpu.memory_space<smem>>
    %51 = vector.broadcast %50 : f32 to vector<2x1xf32>
    %52 = arith.addf %49, %51 : vector<2x1xf32>
    %53 = vector.shape_cast %52 : vector<2x1xf32> to vector<2x1x1xf32>
    %c0_32 = arith.constant 0 : index
    %c0_33 = arith.constant 0 : index
    %c0_34 = arith.constant 0 : index
    %54 = vector.load %arg12[%c0_32, %c0_33, %c0_34] : memref<2x1x1xf32, #tpu.memory_space<vmem>>, vector<2x1x1xf32>
    tpu.vector_store %arg12[%c0_32, %c0_33, %c0_34], %53 {strides = array<i32>} : memref<2x1x1xf32, #tpu.memory_space<vmem>>, vector<2x1x1xf32>,
    return
  }
  func.func @transform_0(%arg0: i32) -> (i32, i32, i32) {
    %c0_i32 = arith.constant 0 : i32
    %c0_i32_0 = arith.constant 0 : i32
    %c0_i32_1 = arith.constant 0 : i32
    return %arg0, %c0_i32, %c0_i32_0 : i32, i32, i32
  }
  func.func @transform_1(%arg0: i32) -> (i32, i32) {
    %c0_i32 = arith.constant 0 : i32
    %c0_i32_0 = arith.constant 0 : i32
    %c0_i32_1 = arith.constant 0 : i32
    return %c0_i32, %c0_i32_0 : i32, i32
  }
  func.func @transform_2(%arg0: i32) -> (i32, i32) {
    %c0_i32 = arith.constant 0 : i32
    %c0_i32_0 = arith.constant 0 : i32
    %c0_i32_1 = arith.constant 0 : i32
    return %c0_i32, %c0_i32_0 : i32, i32
  }
  func.func @transform_3(%arg0: i32) -> (i32, i32) {
    %c0_i32 = arith.constant 0 : i32
    %c0_i32_0 = arith.constant 0 : i32
    %c0_i32_1 = arith.constant 0 : i32
    return %c0_i32, %c0_i32_0 : i32, i32
  }
  func.func @transform_4(%arg0: i32) -> (i32, i32) {
    %c0_i32 = arith.constant 0 : i32
    %c0_i32_0 = arith.constant 0 : i32
    %c0_i32_1 = arith.constant 0 : i32
    return %c0_i32, %c0_i32_0 : i32, i32
  }
  func.func @transform_5(%arg0: i32) -> (i32, i32) {
    %c0_i32 = arith.constant 0 : i32
    %c0_i32_0 = arith.constant 0 : i32
    %c0_i32_1 = arith.constant 0 : i32
    return %c0_i32, %c0_i32_0 : i32, i32
  }
  func.func @transform_6(%arg0: i32) -> (i32, i32) {
    %c0_i32 = arith.constant 0 : i32
    %c0_i32_0 = arith.constant 0 : i32
    %c0_i32_1 = arith.constant 0 : i32
    return %c0_i32, %c0_i32_0 : i32, i32
  }
  func.func @transform_7(%arg0: i32) -> (i32, i32) {
    %c0_i32 = arith.constant 0 : i32
    %c0_i32_0 = arith.constant 0 : i32
    %c0_i32_1 = arith.constant 0 : i32
    return %c0_i32, %c0_i32_0 : i32, i32
  }
  func.func @transform_8(%arg0: i32) -> (i32, i32) {
    %c0_i32 = arith.constant 0 : i32
    %c0_i32_0 = arith.constant 0 : i32
    %c0_i32_1 = arith.constant 0 : i32
    return %c0_i32, %c0_i32_0 : i32, i32
  }
  func.func @transform_9(%arg0: i32) -> (i32, i32) {
    %c0_i32 = arith.constant 0 : i32
    %c0_i32_0 = arith.constant 0 : i32
    %c0_i32_1 = arith.constant 0 : i32
    return %c0_i32, %c0_i32_0 : i32, i32
  }
  func.func @transform_10(%arg0: i32) -> (i32, i32) {
    %c0_i32 = arith.constant 0 : i32
    %c0_i32_0 = arith.constant 0 : i32
    %c0_i32_1 = arith.constant 0 : i32
    return %c0_i32, %c0_i32_0 : i32, i32
  }
  func.func @transform_11(%arg0: i32) -> (i32, i32, i32) {
    %c0_i32 = arith.constant 0 : i32
    %c0_i32_0 = arith.constant 0 : i32
    %c0_i32_1 = arith.constant 0 : i32
    return %arg0, %c0_i32, %c0_i32_0 : i32, i32, i32
  }
}

</mosaic_0001>

<llo_original>
// kernel: tpu_custom_call.1
$region0: #{tpu_custom_call.1}
  #allocation0 [shape = 'u32[]', space=smem, size = 0x4, offset = 0x4, fixed_abs, tag = 'smem constant byte address 0x4 - core index']
  #allocation1 [shape = 'u32[144,128]{1,0:T(1,128)}', space=vmem, size = 0x12000, scoped, tag = 'internal scratch']
  #allocation2 [shape = 'f32[1,1]{1,0:T(1,128)S(6)}', space=smem, size = 0x200, scoped, tag = 'scoped memory for tpu_custom_call.1']
  #allocation3 [shape = 'f32[1,1]{1,0:T(1,128)S(6)}', space=smem, size = 0x200, scoped, tag = 'scoped memory for tpu_custom_call.1']
  %s0 = inlined_call_operand.hbm [shape: f32[4,8,128], index: 0, kind: input, shape index: {}]
  %s1 = inlined_call_operand.hbm [shape: f32[128,128], index: 1, kind: input, shape index: {}]
  %s2 = inlined_call_operand.vmem [shape: f32[1,128], index: 2, kind: input, shape index: {}]
  %s3 = inlined_call_operand.hbm [shape: f32[128,128], index: 3, kind: input, shape index: {}]
  %s4 = inlined_call_operand.vmem [shape: f32[1,128], index: 4, kind: input, shape index: {}]
  %s5 = inlined_call_operand.vmem [shape: f32[1,128], index: 5, kind: input, shape index: {}]
  %s6 = inlined_call_operand.hbm [shape: f32[128,128], index: 6, kind: input, shape index: {}]
  %s7 = inlined_call_operand.vmem [shape: f32[1,128], index: 7, kind: input, shape index: {}]
  %s8 = inlined_call_operand.vmem [shape: f32[1,128], index: 8, kind: input, shape index: {}]
  %s9 = inlined_call_operand.<no memory space> [shape: f32[1,1], index: 9, kind: input, shape index: {}]
  %s10 = inlined_call_operand.<no memory space> [shape: f32[1,1], index: 10, kind: input, shape index: {}]
  %s11 = inlined_call_operand.vmem [shape: f32[4,1,1], index: 11, kind: output, shape index: {}]
  %s12 = sld [smem:[#allocation0]]
  $region93: #{tpu_custom_call.1} parent=0
    _
  %s14 = ssub.s32 1, %s12
  %s15 = scalar_select 0, %s14, %s12
  %16 = sst [smem:[#allocation2]] %s9
  %17 = sst [smem:[#allocation3]] %s10
  $region1: #{tpu_custom_call.1} parent=0
    #allocation4 [shape = 'u8[16384]{0}', space=vmem, size = 0x4000, scoped, tag = 'input window, operand 0']
    #allocation5 [shape = 's32[2]{0}', space=sflag, size = 0x8, scoped, tag = 'scoped memory for tpu_custom_call.1']
    #allocation6 [shape = 'u8[65536]{0}', space=vmem, size = 0x10000, scoped, tag = 'input window, operand 1, single buffered']
    #allocation7 [shape = 's32[1]{0}', space=sflag, size = 0x4, scoped, tag = 'scoped memory for tpu_custom_call.1']
    #allocation8 [shape = 'u8[65536]{0}', space=vmem, size = 0x10000, scoped, tag = 'input window, operand 3, single buffered']
    #allocation9 [shape = 'u8[65536]{0}', space=vmem, size = 0x10000, scoped, tag = 'input window, operand 6, single buffered']
    #allocation10 [shape = 's32[1]{0}', space=sflag, size = 0x4, scoped, tag = 'scoped memory for tpu_custom_call.1']
    %18 = vsyncpa [#allocation5], 0
    %s19 = scalar_lea.sflag [#allocation5], 1
    %20 = vsyncpa %s19, 0
    %21 = vsyncpa [#allocation7], 0
    %22 = vsyncpa [#allocation10], 0
    loop: start=0, step=1, limit=4
    $region2: #{tpu_custom_call.1} parent=1 // loop_pre_header
      _
    $region3: #{tpu_custom_call.1} parent=1 // loop_header
      %s24 = sphi 0, %s28
      %p25 = scmp.ge.s32.totalorder %s24, 4
      %s34 = sphi 0, %s36
      %s37 = sphi 0, %s34
      %s38 = sphi 0, %s37
      %s54 = sphi 0, %s38
      %s58 = sphi 0, %s58
      %s60 = sphi 0, %s58
      %s61 = sphi 0, %s60
      %s75 = sphi 0, %s61
      %s79 = sphi 0, %s79
      %s81 = sphi 0, %s79
      %s82 = sphi 0, %s81
      %s96 = sphi 0, %s82
      %s100 = sphi 0, %s100
      %s102 = sphi 0, %s100
      %s103 = sphi 0, %s102
      %s117 = sphi 0, %s103
      %s121 = sphi 0, %s121
      %s123 = sphi 0, %s121
      %s124 = sphi 0, %s123
      %s138 = sphi 0, %s124
      %s142 = sphi 0, %s142
      %s144 = sphi 0, %s142
      %s145 = sphi 0, %s144
      %s159 = sphi 0, %s145
      %s163 = sphi 0, %s163
      %s165 = sphi 0, %s163
      %s166 = sphi 0, %s165
      %s180 = sphi 0, %s166
      %s184 = sphi 0, %s184
      %s186 = sphi 0, %s184
      %s187 = sphi 0, %s186
      %s201 = sphi 0, %s187
      %s205 = sphi 0, %s205
      %s207 = sphi 0, %s205
      %s208 = sphi 0, %s207
      %s222 = sphi 0, %s208
      %s226 = sphi 0, %s226
      %s228 = sphi 0, %s226
      %s229 = sphi 0, %s228
      %s243 = sphi 0, %s229
      %s247 = sphi 0, %s247
      %s249 = sphi 0, %s247
      %s250 = sphi 0, %s249
      %s264 = sphi 0, %s250
      %s270 = sphi 0, %s272
      %s273 = sphi 0, %s270
      %s274 = sphi 0, %s273
      %s290 = sphi 0, %s274
    $region4: #{tpu_custom_call.1} parent=1 // loop_header_branch
      %27 = sbr.rel (%p25) target = $region8
    $region5: #{tpu_custom_call.1} parent=1 // loop_body
      %s29 = ssub.s32 %s24, 1
      %s30 = ssub.s32 %s24, 2
      %s31 = sadd.s32 %s24, 1
      %s32 = ssub.s32 %s24, %s31
      %p33 = scmp.eq.s32.totalorder %s32, 0
      %s35 = sadd.s32 %s34, 1
      %s36 = scalar_select %p33, %s34, %s35
      %p39 = pneg %p33
      %p40 = scmp.eq.s32.totalorder %s24, 1
      %p41 = por %p39, %p40
      %p42 = scmp.ne.s32.totalorder %s34, %s37
      %p43 = scmp.eq.s32.totalorder %s24, 0
      %p44 = por %p42, %p43
      %p45 = scmp.ne.s32.totalorder %s34, %s37
      %p46 = scmp.eq.s32.totalorder %s29, 1
      %p47 = por %p45, %p46
      %p48 = scmp.ne.s32.totalorder %s37, %s38
      %p49 = scmp.eq.s32.totalorder %s29, 0
      %p50 = por %p48, %p49
      %p51 = scmp.ne.s32.totalorder %s37, %s38
      %p52 = scmp.eq.s32.totalorder %s30, 1
      %p53 = por %p51, %p52
      %p55 = scmp.ne.s32.totalorder %s38, %s54
      %p56 = scmp.eq.s32.totalorder %s30, 0
      %p57 = por %p55, %p56
      %s59 = sadd.s32 %s58, 1
      %p62 = scmp.eq.s32.totalorder %s24, 1
      %p63 = scmp.ne.s32.totalorder %s58, %s60
      %p64 = scmp.eq.s32.totalorder %s24, 0
      %p65 = por %p63, %p64
      %p66 = scmp.ne.s32.totalorder %s58, %s60
      %p67 = scmp.eq.s32.totalorder %s29, 1
      %p68 = por %p66, %p67
      %p69 = scmp.ne.s32.totalorder %s60, %s61
      %p70 = scmp.eq.s32.totalorder %s29, 0
      %p71 = por %p69, %p70
      %p72 = scmp.ne.s32.totalorder %s60, %s61
      %p73 = scmp.eq.s32.totalorder %s30, 1
      %p74 = por %p72, %p73
      %p76 = scmp.ne.s32.totalorder %s61, %s75
      %p77 = scmp.eq.s32.totalorder %s30, 0
      %p78 = por %p76, %p77
      %s80 = sadd.s32 %s79, 1
      %p83 = scmp.eq.s32.totalorder %s24, 1
      %p84 = scmp.ne.s32.totalorder %s79, %s81
      %p85 = scmp.eq.s32.totalorder %s24, 0
      %p86 = por %p84, %p85
      %p87 = scmp.ne.s32.totalorder %s79, %s81
      %p88 = scmp.eq.s32.totalorder %s29, 1
      %p89 = por %p87, %p88
      %p90 = scmp.ne.s32.totalorder %s81, %s82
      %p91 = scmp.eq.s32.totalorder %s29, 0
      %p92 = por %p90, %p91
      %p93 = scmp.ne.s32.totalorder %s81, %s82
      %p94 = scmp.eq.s32.totalorder %s30, 1
      %p95 = por %p93, %p94
      %p97 = scmp.ne.s32.totalorder %s82, %s96
      %p98 = scmp.eq.s32.totalorder %s30, 0
      %p99 = por %p97, %p98
      %s101 = sadd.s32 %s100, 1
      %p104 = scmp.eq.s32.totalorder %s24, 1
      %p105 = scmp.ne.s32.totalorder %s100, %s102
      %p106 = scmp.eq.s32.totalorder %s24, 0
      %p107 = por %p105, %p106
      %p108 = scmp.ne.s32.totalorder %s100, %s102
      %p109 = scmp.eq.s32.totalorder %s29, 1
      %p110 = por %p108, %p109
      %p111 = scmp.ne.s32.totalorder %s102, %s103
      %p112 = scmp.eq.s32.totalorder %s29, 0
      %p113 = por %p111, %p112
      %p114 = scmp.ne.s32.totalorder %s102, %s103
      %p115 = scmp.eq.s32.totalorder %s30, 1
      %p116 = por %p114, %p115
      %p118 = scmp.ne.s32.totalorder %s103, %s117
      %p119 = scmp.eq.s32.totalorder %s30, 0
      %p120 = por %p118, %p119
      %s122 = sadd.s32 %s121, 1
      %p125 = scmp.eq.s32.totalorder %s24, 1
      %p126 = scmp.ne.s32.totalorder %s121, %s123
      %p127 = scmp.eq.s32.totalorder %s24, 0
      %p128 = por %p126, %p127
      %p129 = scmp.ne.s32.totalorder %s121, %s123
      %p130 = scmp.eq.s32.totalorder %s29, 1
      %p131 = por %p129, %p130
      %p132 = scmp.ne.s32.totalorder %s123, %s124
      %p133 = scmp.eq.s32.totalorder %s29, 0
      %p134 = por %p132, %p133
      %p135 = scmp.ne.s32.totalorder %s123, %s124
      %p136 = scmp.eq.s32.totalorder %s30, 1
      %p137 = por %p135, %p136
      %p139 = scmp.ne.s32.totalorder %s124, %s138
      %p140 = scmp.eq.s32.totalorder %s30, 0
      %p141 = por %p139, %p140
      %s143 = sadd.s32 %s142, 1
      %p146 = scmp.eq.s32.totalorder %s24, 1
      %p147 = scmp.ne.s32.totalorder %s142, %s144
      %p148 = scmp.eq.s32.totalorder %s24, 0
      %p149 = por %p147, %p148
      %p150 = scmp.ne.s32.totalorder %s142, %s144
      %p151 = scmp.eq.s32.totalorder %s29, 1
      %p152 = por %p150, %p151
      %p153 = scmp.ne.s32.totalorder %s144, %s145
      %p154 = scmp.eq.s32.totalorder %s29, 0
      %p155 = por %p153, %p154
      %p156 = scmp.ne.s32.totalorder %s144, %s145
      %p157 = scmp.eq.s32.totalorder %s30, 1
      %p158 = por %p156, %p157
      %p160 = scmp.ne.s32.totalorder %s145, %s159
      %p161 = scmp.eq.s32.totalorder %s30, 0
      %p162 = por %p160, %p161
      %s164 = sadd.s32 %s163, 1
      %p167 = scmp.eq.s32.totalorder %s24, 1
      %p168 = scmp.ne.s32.totalorder %s163, %s165
      %p169 = scmp.eq.s32.totalorder %s24, 0
      %p170 = por %p168, %p169
      %p171 = scmp.ne.s32.totalorder %s163, %s165
      %p172 = scmp.eq.s32.totalorder %s29, 1
      %p173 = por %p171, %p172
      %p174 = scmp.ne.s32.totalorder %s165, %s166
      %p175 = scmp.eq.s32.totalorder %s29, 0
      %p176 = por %p174, %p175
      %p177 = scmp.ne.s32.totalorder %s165, %s166
      %p178 = scmp.eq.s32.totalorder %s30, 1
      %p179 = por %p177, %p178
      %p181 = scmp.ne.s32.totalorder %s166, %s180
      %p182 = scmp.eq.s32.totalorder %s30, 0
      %p183 = por %p181, %p182
      %s185 = sadd.s32 %s184, 1
      %p188 = scmp.eq.s32.totalorder %s24, 1
      %p189 = scmp.ne.s32.totalorder %s184, %s186
      %p190 = scmp.eq.s32.totalorder %s24, 0
      %p191 = por %p189, %p190
      %p192 = scmp.ne.s32.totalorder %s184, %s186
      %p193 = scmp.eq.s32.totalorder %s29, 1
      %p194 = por %p192, %p193
      %p195 = scmp.ne.s32.totalorder %s186, %s187
      %p196 = scmp.eq.s32.totalorder %s29, 0
      %p197 = por %p195, %p196
      %p198 = scmp.ne.s32.totalorder %s186, %s187
      %p199 = scmp.eq.s32.totalorder %s30, 1
      %p200 = por %p198, %p199
      %p202 = scmp.ne.s32.totalorder %s187, %s201
      %p203 = scmp.eq.s32.totalorder %s30, 0
      %p204 = por %p202, %p203
      %s206 = sadd.s32 %s205, 1
      %p209 = scmp.eq.s32.totalorder %s24, 1
      %p210 = scmp.ne.s32.totalorder %s205, %s207
      %p211 = scmp.eq.s32.totalorder %s24, 0
      %p212 = por %p210, %p211
      %p213 = scmp.ne.s32.totalorder %s205, %s207
      %p214 = scmp.eq.s32.totalorder %s29, 1
      %p215 = por %p213, %p214
      %p216 = scmp.ne.s32.totalorder %s207, %s208
      %p217 = scmp.eq.s32.totalorder %s29, 0
      %p218 = por %p216, %p217
      %p219 = scmp.ne.s32.totalorder %s207, %s208
      %p220 = scmp.eq.s32.totalorder %s30, 1
      %p221 = por %p219, %p220
      %p223 = scmp.ne.s32.totalorder %s208, %s222
      %p224 = scmp.eq.s32.totalorder %s30, 0
      %p225 = por %p223, %p224
      %s227 = sadd.s32 %s226, 1
      %p230 = scmp.eq.s32.totalorder %s24, 1
      %p231 = scmp.ne.s32.totalorder %s226, %s228
      %p232 = scmp.eq.s32.totalorder %s24, 0
      %p233 = por %p231, %p232
      %p234 = scmp.ne.s32.totalorder %s226, %s228
      %p235 = scmp.eq.s32.totalorder %s29, 1
      %p236 = por %p234, %p235
      %p237 = scmp.ne.s32.totalorder %s228, %s229
      %p238 = scmp.eq.s32.totalorder %s29, 0
      %p239 = por %p237, %p238
      %p240 = scmp.ne.s32.totalorder %s228, %s229
      %p241 = scmp.eq.s32.totalorder %s30, 1
      %p242 = por %p240, %p241
      %p244 = scmp.ne.s32.totalorder %s229, %s243
      %p245 = scmp.eq.s32.totalorder %s30, 0
      %p246 = por %p244, %p245
      %s248 = sadd.s32 %s247, 1
      %p251 = scmp.eq.s32.totalorder %s24, 1
      %p252 = scmp.ne.s32.totalorder %s247, %s249
      %p253 = scmp.eq.s32.totalorder %s24, 0
      %p254 = por %p252, %p253
      %p255 = scmp.ne.s32.totalorder %s247, %s249
      %p256 = scmp.eq.s32.totalorder %s29, 1
      %p257 = por %p255, %p256
      %p258 = scmp.ne.s32.totalorder %s249, %s250
      %p259 = scmp.eq.s32.totalorder %s29, 0
      %p260 = por %p258, %p259
      %p261 = scmp.ne.s32.totalorder %s249, %s250
      %p262 = scmp.eq.s32.totalorder %s30, 1
      %p263 = por %p261, %p262
      %p265 = scmp.ne.s32.totalorder %s250, %s264
      %p266 = scmp.eq.s32.totalorder %s30, 0
      %p267 = por %p265, %p266
      %s268 = ssub.s32 %s24, %s31
      %p269 = scmp.eq.s32.totalorder %s268, 0
      %s271 = sadd.s32 %s270, 1
      %s272 = scalar_select %p269, %s270, %s271
      %p275 = pneg %p269
      %p276 = scmp.eq.s32.totalorder %s24, 1
      %p277 = por %p275, %p276
      %p278 = scmp.ne.s32.totalorder %s270, %s273
      %p279 = scmp.eq.s32.totalorder %s24, 0
      %p280 = por %p278, %p279
      %p281 = scmp.ne.s32.totalorder %s270, %s273
      %p282 = scmp.eq.s32.totalorder %s29, 1
      %p283 = por %p281, %p282
      %p284 = scmp.ne.s32.totalorder %s273, %s274
      %p285 = scmp.eq.s32.totalorder %s29, 0
      %p286 = por %p284, %p285
      %p287 = scmp.ne.s32.totalorder %s273, %s274
      %p288 = scmp.eq.s32.totalorder %s30, 1
      %p289 = por %p287, %p288
      %p291 = scmp.ne.s32.totalorder %s274, %s290
      %p292 = scmp.eq.s32.totalorder %s30, 0
      %p293 = por %p291, %p292
      %p294 = scmp.le.s32.totalorder 1, %s24
      %p295 = scmp.lt.s32.totalorder %s24, 3
      %p296 = pnand %p294, %p295
      %p297 = pneg %p296
      // Predicated region
      $region9: #{tpu_custom_call.1} parent=5 // pred_check
        _
      $region10: #{tpu_custom_call.1} parent=5 // pred_check_branch
        %299 = sbr.rel (%p296) target = $region12
      $region11: #{tpu_custom_call.1} parent=5 // pred_region
        %s300 = ssub.s32 %s24, 1
        // Predicated region
        $region13: #{tpu_custom_call.1} parent=11 // pred_check
          %p301 = pneg %p71
        $region14: #{tpu_custom_call.1} parent=11 // pred_check_branch
          %303 = sbr.rel (%p301) target = $region16
        $region15: #{tpu_custom_call.1} parent=11 // pred_region
          %s305 = ssub.s32 2048, 2048
          %306 = vsyncadd [#allocation7], %s305
          %s307 = sshll.u32 [#allocation6], 4
          %s308 = int_to_ptr.vmem [resolvable:$true] %s307
          %313 = dma.hbm_to_vmem [thread:$0]  %s1, 2048, %s308, [#allocation7], 128, 128, 8
        $region16: #{tpu_custom_call.1} parent=11 // pred_fallthru
          _
        // Predicated region
        $region17: #{tpu_custom_call.1} parent=11 // pred_check
          %p314 = pneg %p92
        $region18: #{tpu_custom_call.1} parent=11 // pred_check_branch
          %316 = sbr.rel (%p314) target = $region20
        $region19: #{tpu_custom_call.1} parent=11 // pred_region
          _
        $region20: #{tpu_custom_call.1} parent=11 // pred_fallthru
          _
        // Predicated region
        $region21: #{tpu_custom_call.1} parent=11 // pred_check
          %p317 = pneg %p113
        $region22: #{tpu_custom_call.1} parent=11 // pred_check_branch
          %319 = sbr.rel (%p317) target = $region24
        $region23: #{tpu_custom_call.1} parent=11 // pred_region
          %s321 = ssub.s32 2048, 2048
          %322 = vsyncadd [#allocation7], %s321
          %s323 = sshll.u32 [#allocation8], 4
          %s324 = int_to_ptr.vmem [resolvable:$true] %s323
          %329 = dma.hbm_to_vmem [thread:$0]  %s3, 2048, %s324, [#allocation7], 128, 128, 8
        $region24: #{tpu_custom_call.1} parent=11 // pred_fallthru
          _
        // Predicated region
        $region25: #{tpu_custom_call.1} parent=11 // pred_check
          %p330 = pneg %p134
        $region26: #{tpu_custom_call.1} parent=11 // pred_check_branch
          %332 = sbr.rel (%p330) target = $region28
        $region27: #{tpu_custom_call.1} parent=11 // pred_region
          _
        $region28: #{tpu_custom_call.1} parent=11 // pred_fallthru
          _
        // Predicated region
        $region29: #{tpu_custom_call.1} parent=11 // pred_check
          %p333 = pneg %p155
        $region30: #{tpu_custom_call.1} parent=11 // pred_check_branch
          %335 = sbr.rel (%p333) target = $region32
        $region31: #{tpu_custom_call.1} parent=11 // pred_region
          _
        $region32: #{tpu_custom_call.1} parent=11 // pred_fallthru
          _
        // Predicated region
        $region33: #{tpu_custom_call.1} parent=11 // pred_check
          %p336 = pneg %p176
        $region34: #{tpu_custom_call.1} parent=11 // pred_check_branch
          %338 = sbr.rel (%p336) target = $region36
        $region35: #{tpu_custom_call.1} parent=11 // pred_region
          %s340 = ssub.s32 2048, 2048
          %341 = vsyncadd [#allocation10], %s340
          %s342 = sshll.u32 [#allocation9], 4
          %s343 = int_to_ptr.vmem [resolvable:$true] %s342
          %348 = dma.hbm_to_vmem [thread:$0]  %s6, 2048, %s343, [#allocation10], 128, 128, 8
        $region36: #{tpu_custom_call.1} parent=11 // pred_fallthru
          _
        // Predicated region
        $region37: #{tpu_custom_call.1} parent=11 // pred_check
          %p349 = pneg %p197
        $region38: #{tpu_custom_call.1} parent=11 // pred_check_branch
          %351 = sbr.rel (%p349) target = $region40
        $region39: #{tpu_custom_call.1} parent=11 // pred_region
          _
        $region40: #{tpu_custom_call.1} parent=11 // pred_fallthru
          _
        // Predicated region
        $region41: #{tpu_custom_call.1} parent=11 // pred_check
          %p352 = pneg %p218
        $region42: #{tpu_custom_call.1} parent=11 // pred_check_branch
          %354 = sbr.rel (%p352) target = $region44
        $region43: #{tpu_custom_call.1} parent=11 // pred_region
          _
        $region44: #{tpu_custom_call.1} parent=11 // pred_fallthru
          _
        // Predicated region
        $region45: #{tpu_custom_call.1} parent=11 // pred_check
          %p355 = pneg %p239
        $region46: #{tpu_custom_call.1} parent=11 // pred_check_branch
          %357 = sbr.rel (%p355) target = $region48
        $region47: #{tpu_custom_call.1} parent=11 // pred_region
          _
        $region48: #{tpu_custom_call.1} parent=11 // pred_fallthru
          _
        // Predicated region
        $region49: #{tpu_custom_call.1} parent=11 // pred_check
          %p358 = pneg %p260
        $region50: #{tpu_custom_call.1} parent=11 // pred_check_branch
          %360 = sbr.rel (%p358) target = $region52
        $region51: #{tpu_custom_call.1} parent=11 // pred_region
          _
        $region52: #{tpu_custom_call.1} parent=11 // pred_fallthru
          _
      $region12: #{tpu_custom_call.1} parent=5 // pred_fallthru
        _
      %p361 = scmp.lt.s32.totalorder %s24, 2
      // Predicated region
      $region53: #{tpu_custom_call.1} parent=5 // pred_check
        %p362 = pneg %p361
      $region54: #{tpu_custom_call.1} parent=5 // pred_check_branch
        %364 = sbr.rel (%p362) target = $region56
      $region55: #{tpu_custom_call.1} parent=5 // pred_region
        // Predicated region
        $region57: #{tpu_custom_call.1} parent=55 // pred_check
          %p365 = pneg %p44
        $region58: #{tpu_custom_call.1} parent=55 // pred_check_branch
          %367 = sbr.rel (%p365) target = $region60
        $region59: #{tpu_custom_call.1} parent=55 // pred_region
          %s368 = sand.u32 %s34, 1
          %s369 = scalar_lea.sflag [#allocation5], %s368
          %s370 = sand.u32 %s34, 1
          %s371 = smul.addr %s370, 16
          %s372 = scalar_lea.vmem [#allocation4], %s371
          %s373 = smul.u32 2, %s24
          %s375 = ssub.s32 256, 256
          %376 = vsyncadd %s369, %s375
          %s377 = smul.addr %s373, 128
          %s378 = scalar_lea.hbm %s0, %s377
          %s379 = sshll.u32 %s372, 4
          %s380 = int_to_ptr.vmem [resolvable:$true] %s379
          %385 = dma.hbm_to_vmem [thread:$0]  %s378, 256, %s380, %s369, 128, 128, 8
        $region60: #{tpu_custom_call.1} parent=55 // pred_fallthru
          _
      $region56: #{tpu_custom_call.1} parent=5 // pred_fallthru
        _
      %p386 = scmp.le.s32.totalorder 1, %s24
      %p387 = scmp.lt.s32.totalorder %s24, 3
      %p388 = pnand %p386, %p387
      %p389 = pneg %p388
      // Predicated region
      $region61: #{tpu_custom_call.1} parent=5 // pred_check
        _
      $region62: #{tpu_custom_call.1} parent=5 // pred_check_branch
        %391 = sbr.rel (%p388) target = $region64
      $region63: #{tpu_custom_call.1} parent=5 // pred_region
        %s392 = ssub.s32 %s24, 1
        %s393 = sand.u32 %s37, 1
        %s394 = scalar_lea.sflag [#allocation5], %s393
        %s395 = sand.u32 %s37, 1
        %s396 = smul.addr %s395, 16
        %s397 = scalar_lea.vmem [#allocation4], %s396
        // Predicated region
        $region65: #{tpu_custom_call.1} parent=63 // pred_check
          %p398 = pneg %p50
        $region66: #{tpu_custom_call.1} parent=63 // pred_check_branch
          %400 = sbr.rel (%p398) target = $region68
        $region67: #{tpu_custom_call.1} parent=63 // pred_region
          %401 = dma.done %s394, 256
        $region68: #{tpu_custom_call.1} parent=63 // pred_fallthru
          _
        // Predicated region
        $region69: #{tpu_custom_call.1} parent=63 // pred_check
          %p402 = pneg %p71
        $region70: #{tpu_custom_call.1} parent=63 // pred_check_branch
          %404 = sbr.rel (%p402) target = $region72
        $region71: #{tpu_custom_call.1} parent=63 // pred_region
          %405 = dma.done [#allocation7], 2048
        $region72: #{tpu_custom_call.1} parent=63 // pred_fallthru
          _
        // Predicated region
        $region73: #{tpu_custom_call.1} parent=63 // pred_check
          %p406 = pneg %p113
        $region74: #{tpu_custom_call.1} parent=63 // pred_check_branch
          %408 = sbr.rel (%p406) target = $region76
        $region75: #{tpu_custom_call.1} parent=63 // pred_region
          %409 = dma.done [#allocation7], 2048
        $region76: #{tpu_custom_call.1} parent=63 // pred_fallthru
          _
        // Predicated region
        $region77: #{tpu_custom_call.1} parent=63 // pred_check
          %p410 = pneg %p176
        $region78: #{tpu_custom_call.1} parent=63 // pred_check_branch
          %412 = sbr.rel (%p410) target = $region80
        $region79: #{tpu_custom_call.1} parent=63 // pred_region
          %413 = dma.done [#allocation10], 2048
        $region80: #{tpu_custom_call.1} parent=63 // pred_fallthru
          _
        %s414 = sand.u32 %s37, 1
        %s415 = scalar_lea.sflag [#allocation5], %s414
        %s416 = sand.u32 %s37, 1
        %s417 = smul.addr %s416, 16
        %s418 = scalar_lea.vmem [#allocation4], %s417
        %p419 = pneg %p50
        %p420 = pneg %p47
        %p421 = pneg %p71
        %p422 = pneg %p68
        %p423 = pneg %p92
        %p424 = pneg %p89
        %p425 = pneg %p113
        %p426 = pneg %p110
        %p427 = pneg %p134
        %p428 = pneg %p131
        %p429 = pneg %p155
        %p430 = pneg %p152
        %p431 = pneg %p176
        %p432 = pneg %p173
        %p433 = pneg %p197
        %p434 = pneg %p194
        %p435 = pneg %p218
        %p436 = pneg %p215
        %p437 = pneg %p239
        %p438 = pneg %p236
        %p439 = pneg %p260
        %p440 = pneg %p257
        %p441 = pneg %p286
        %p442 = pneg %p283
        %s443 = smul.u32 2, %s29
        %p444 = scmp.lt.s32.totalorder %s443, 3
        %s445 = scalar_select %p444, %s443, 3
        %s446 = scalar_lea.vmem %s11, %s445
        %s447 = smul.u32 2, %s29
        %s448 = smul.u32 2, %s29
        %p449 = scmp.lt.s32.totalorder %s448, 3
        %s450 = scalar_select %p449, %s448, 3
        %s451 = scalar_lea.vmem %s11, %s450
        %s452 = smul.u32 2, %s29
        %v453 = vld [vmem:[%s397] sm:$0xff]
        %v454 = vld [vmem:[%s397 + $0x8] sm:$0xff]
        %v455 = vld [vmem:[#allocation6] sm:$0xff]
        %v456 = vld [vmem:[#allocation6 + $0x8] sm:$0xff]
        %v457 = vld [vmem:[#allocation6 + $0x10] sm:$0xff]
        %v458 = vld [vmem:[#allocation6 + $0x18] sm:$0xff]
        %v459 = vld [vmem:[#allocation6 + $0x20] sm:$0xff]
        %v460 = vld [vmem:[#allocation6 + $0x28] sm:$0xff]
        %v461 = vld [vmem:[#allocation6 + $0x30] sm:$0xff]
        %v462 = vld [vmem:[#allocation6 + $0x38] sm:$0xff]
        %v463 = vld [vmem:[#allocation6 + $0x40] sm:$0xff]
        %v464 = vld [vmem:[#allocation6 + $0x48] sm:$0xff]
        %v465 = vld [vmem:[#allocation6 + $0x50] sm:$0xff]
        %v466 = vld [vmem:[#allocation6 + $0x58] sm:$0xff]
        %v467 = vld [vmem:[#allocation6 + $0x60] sm:$0xff]
        %v468 = vld [vmem:[#allocation6 + $0x68] sm:$0xff]
        %v469 = vld [vmem:[#allocation6 + $0x70] sm:$0xff]
        %v470 = vld [vmem:[#allocation6 + $0x78] sm:$0xff]
        %v471 = vld [vmem:[%s2] sm:$0x1]
        %v473 = vlaneseq
        %v474 = vshrl.u32 %v473, 7
        %v475 = vsub.s32 0, %v474
        %v476 = vrot.slane %v471, %v475
        %478 = vmatprep.subr.mxu0 0.0
        %479 = vmatpush1.msra.mxu0 %v455
        %480 = vmatprep.subr.mxu0 0.0
        %481 = vmatpush1.msra.mxu0 %v456
        %482 = vmatprep.subr.mxu0 0.0
        %483 = vmatpush1.msra.mxu0 %v457
        %484 = vmatprep.subr.mxu0 0.0
        %485 = vmatpush1.msra.mxu0 %v458
        %486 = vmatprep.subr.mxu0 0.0
        %487 = vmatpush1.msra.mxu0 %v459
        %488 = vmatprep.subr.mxu0 0.0
        %489 = vmatpush1.msra.mxu0 %v460
        %490 = vmatprep.subr.mxu0 0.0
        %491 = vmatpush1.msra.mxu0 %v461
        %492 = vmatprep.subr.mxu0 0.0
        %493 = vmatpush1.msra.mxu0 %v462
        %494 = vmatprep.subr.mxu0 0.0
        %495 = vmatpush1.msra.mxu0 %v463
        %496 = vmatprep.subr.mxu0 0.0
        %497 = vmatpush1.msra.mxu0 %v464
        %498 = vmatprep.subr.mxu0 0.0
        %499 = vmatpush1.msra.mxu0 %v465
        %500 = vmatprep.subr.mxu0 0.0
        %501 = vmatpush1.msra.mxu0 %v466
        %502 = vmatprep.subr.mxu0 0.0
        %503 = vmatpush1.msra.mxu0 %v467
        %504 = vmatprep.subr.mxu0 0.0
        %505 = vmatpush1.msra.mxu0 %v468
        %506 = vmatprep.subr.mxu0 0.0
        %507 = vmatpush1.msra.mxu0 %v469
        %508 = vmatprep.subr.mxu0 0.0
        %509 = vmatpush1.msra.mxu0 %v470
        %510 = vmatprep.subr.mxu0 0.0
        %511 = vmatpush1.msra.mxu0 0.0
        %512 = vmatprep.subr.mxu0 0.0
        %513 = vmatpush1.msra.mxu0 0.0
        %514 = vmatprep.subr.mxu0 0.0
        %515 = vmatpush1.msra.mxu0 0.0
        %516 = vmatprep.subr.mxu0 0.0
        %517 = vmatpush1.msra.mxu0 0.0
        %518 = vmatprep.subr.mxu0 0.0
        %519 = vmatpush1.msra.mxu0 0.0
        %520 = vmatprep.subr.mxu0 0.0
        %521 = vmatpush1.msra.mxu0 0.0
        %522 = vmatprep.subr.mxu0 0.0
        %523 = vmatpush1.msra.mxu0 0.0
        %524 = vmatprep.subr.mxu0 0.0
        %525 = vmatpush1.msra.mxu0 0.0
        %526 = vmatprep.subr.mxu0 0.0
        %527 = vmatpush1.msra.mxu0 0.0
        %528 = vmatprep.subr.mxu0 0.0
        %529 = vmatpush1.msra.mxu0 0.0
        %530 = vmatprep.subr.mxu0 0.0
        %531 = vmatpush1.msra.mxu0 0.0
        %532 = vmatprep.subr.mxu0 0.0
        %533 = vmatpush1.msra.mxu0 0.0
        %534 = vmatprep.subr.mxu0 0.0
        %535 = vmatpush1.msra.mxu0 0.0
        %536 = vmatprep.subr.mxu0 0.0
        %537 = vmatpush1.msra.mxu0 0.0
        %538 = vmatprep.subr.mxu0 0.0
        %539 = vmatpush1.msra.mxu0 0.0
        %540 = vmatprep.subr.mxu0 0.0
        %541 = vmatpush1.msra.mxu0 0.0
        %542 = vmatprep.mubr.f32.mxu0 0.0
        %543 = vmatmul.mubr.f32.gmra.mrb[0].mxu0 %v453
        %v544 = vpop.f32.mrb[0].mxu0
        %v545 = vadd.f32 %v476, %v544
        %v546 = vpop.f32.mrb[0].mxu0
        %547 = vmatprep.mubr.f32.mxu0 0.0
        %548 = vmatmul.mubr.f32.gmra.mrb[0].mxu0 %v454
        %v549 = vpop.f32.mrb[0].mxu0
        %v550 = vadd.f32 %v476, %v549
        %v551 = vpop.f32.mrb[0].mxu0
        %552 = vdwg.mxu0
        %v553 = vmax.f32 %v545, 0.0
        %v554 = vmax.f32 %v550, 0.0
        %v555 = vld [vmem:[#allocation8] sm:$0xff]
        %v556 = vld [vmem:[#allocation8 + $0x8] sm:$0xff]
        %v557 = vld [vmem:[#allocation8 + $0x10] sm:$0xff]
        %v558 = vld [vmem:[#allocation8 + $0x18] sm:$0xff]
        %v559 = vld [vmem:[#allocation8 + $0x20] sm:$0xff]
        %v560 = vld [vmem:[#allocation8 + $0x28] sm:$0xff]
        %v561 = vld [vmem:[#allocation8 + $0x30] sm:$0xff]
        %v562 = vld [vmem:[#allocation8 + $0x38] sm:$0xff]
        %v563 = vld [vmem:[#allocation8 + $0x40] sm:$0xff]
        %v564 = vld [vmem:[#allocation8 + $0x48] sm:$0xff]
        %v565 = vld [vmem:[#allocation8 + $0x50] sm:$0xff]
        %v566 = vld [vmem:[#allocation8 + $0x58] sm:$0xff]
        %v567 = vld [vmem:[#allocation8 + $0x60] sm:$0xff]
        %v568 = vld [vmem:[#allocation8 + $0x68] sm:$0xff]
        %v569 = vld [vmem:[#allocation8 + $0x70] sm:$0xff]
        %v570 = vld [vmem:[#allocation8 + $0x78] sm:$0xff]
        %v571 = vld [vmem:[%s4] sm:$0x1]
        %v573 = vlaneseq
        %v574 = vshrl.u32 %v573, 7
        %v575 = vsub.s32 0, %v574
        %v576 = vrot.slane %v571, %v575
        %578 = vmatprep.subr.mxu0 0.0
        %579 = vmatpush1.msra.mxu0 %v555
        %580 = vmatprep.subr.mxu0 0.0
        %581 = vmatpush1.msra.mxu0 %v556
        %582 = vmatprep.subr.mxu0 0.0
        %583 = vmatpush1.msra.mxu0 %v557
        %584 = vmatprep.subr.mxu0 0.0
        %585 = vmatpush1.msra.mxu0 %v558
        %586 = vmatprep.subr.mxu0 0.0
        %587 = vmatpush1.msra.mxu0 %v559
        %588 = vmatprep.subr.mxu0 0.0
        %589 = vmatpush1.msra.mxu0 %v560
        %590 = vmatprep.subr.mxu0 0.0
        %591 = vmatpush1.msra.mxu0 %v561
        %592 = vmatprep.subr.mxu0 0.0
        %593 = vmatpush1.msra.mxu0 %v562
        %594 = vmatprep.subr.mxu0 0.0
        %595 = vmatpush1.msra.mxu0 %v563
        %596 = vmatprep.subr.mxu0 0.0
        %597 = vmatpush1.msra.mxu0 %v564
        %598 = vmatprep.subr.mxu0 0.0
        %599 = vmatpush1.msra.mxu0 %v565
        %600 = vmatprep.subr.mxu0 0.0
        %601 = vmatpush1.msra.mxu0 %v566
        %602 = vmatprep.subr.mxu0 0.0
        %603 = vmatpush1.msra.mxu0 %v567
        %604 = vmatprep.subr.mxu0 0.0
        %605 = vmatpush1.msra.mxu0 %v568
        %606 = vmatprep.subr.mxu0 0.0
        %607 = vmatpush1.msra.mxu0 %v569
        %608 = vmatprep.subr.mxu0 0.0
        %609 = vmatpush1.msra.mxu0 %v570
        %610 = vmatprep.subr.mxu0 0.0
        %611 = vmatpush1.msra.mxu0 0.0
        %612 = vmatprep.subr.mxu0 0.0
        %613 = vmatpush1.msra.mxu0 0.0
        %614 = vmatprep.subr.mxu0 0.0
        %615 = vmatpush1.msra.mxu0 0.0
        %616 = vmatprep.subr.mxu0 0.0
        %617 = vmatpush1.msra.mxu0 0.0
        %618 = vmatprep.subr.mxu0 0.0
        %619 = vmatpush1.msra.mxu0 0.0
        %620 = vmatprep.subr.mxu0 0.0
        %621 = vmatpush1.msra.mxu0 0.0
        %622 = vmatprep.subr.mxu0 0.0
        %623 = vmatpush1.msra.mxu0 0.0
        %624 = vmatprep.subr.mxu0 0.0
        %625 = vmatpush1.msra.mxu0 0.0
        %626 = vmatprep.subr.mxu0 0.0
        %627 = vmatpush1.msra.mxu0 0.0
        %628 = vmatprep.subr.mxu0 0.0
        %629 = vmatpush1.msra.mxu0 0.0
        %630 = vmatprep.subr.mxu0 0.0
        %631 = vmatpush1.msra.mxu0 0.0
        %632 = vmatprep.subr.mxu0 0.0
        %633 = vmatpush1.msra.mxu0 0.0
        %634 = vmatprep.subr.mxu0 0.0
        %635 = vmatpush1.msra.mxu0 0.0
        %636 = vmatprep.subr.mxu0 0.0
        %637 = vmatpush1.msra.mxu0 0.0
        %638 = vmatprep.subr.mxu0 0.0
        %639 = vmatpush1.msra.mxu0 0.0
        %640 = vmatprep.subr.mxu0 0.0
        %641 = vmatpush1.msra.mxu0 0.0
        %642 = vmatprep.mubr.f32.mxu0 0.0
        %643 = vmatmul.mubr.f32.gmra.mrb[0].mxu0 %v553
        %v644 = vpop.f32.mrb[0].mxu0
        %v645 = vadd.f32 %v576, %v644
        %v646 = vpop.f32.mrb[0].mxu0
        %647 = vmatprep.mubr.f32.mxu0 0.0
        %648 = vmatmul.mubr.f32.gmra.mrb[0].mxu0 %v554
        %v649 = vpop.f32.mrb[0].mxu0
        %v650 = vadd.f32 %v576, %v649
        %v651 = vpop.f32.mrb[0].mxu0
        %652 = vdwg.mxu0
        %v653 = vmax.f32 %v645, 0.0
        %v654 = vmax.f32 %v650, 0.0
        %v655 = vld [vmem:[%s5] sm:$0x1]
        %v657 = vlaneseq
        %v658 = vshrl.u32 %v657, 7
        %v659 = vsub.s32 0, %v658
        %v660 = vrot.slane %v655, %v659
        %v662 = vmul.f32 %v653, %v660
        %v663 = vmul.f32 %v654, %v660
        %664 = vadd.xlane.f32.xlu0 %v662
        %v665 = vpop.xlane.xlu0 %664
        %666 = vadd.xlane.f32.xlu0 %v663
        %v667 = vpop.xlane.xlu0 %666
        %s668 = sld [smem:[#allocation2]]
        %v669 = vstv %s668
        %v670 = vadd.f32 %v665, %v669
        %v671 = vadd.f32 %v667, %v669
        %v672 = vrot.slane %v670, 4
        %v673 = vmax.f32 %v670, %v672
        %v674 = vrot.slane %v673, 2
        %v675 = vmax.f32 %v673, %v674
        %v676 = vrot.slane %v675, 1
        %v677 = vmax.f32 %v675, %v676
        %v678 = vrot.slane %v671, 4
        %v679 = vmax.f32 %v671, %v678
        %v680 = vrot.slane %v679, 2
        %v681 = vmax.f32 %v679, %v680
        %v682 = vrot.slane %v681, 1
        %v683 = vmax.f32 %v681, %v682
        %v684 = vsub.f32 %v670, %v677
        %v685 = vsub.f32 %v671, %v683
        %v686 = vmul.f32 %v684, 1.442695
        %v687 = vpow.pop %v686
        %v688 = vmul.f32 %v685, 1.442695
        %v689 = vpow.pop %v688
        %v690 = vrot.slane %v687, 4
        %v691 = vadd.f32 %v687, %v690
        %v692 = vrot.slane %v691, 2
        %v693 = vadd.f32 %v691, %v692
        %v694 = vrot.slane %v693, 1
        %v695 = vadd.f32 %v693, %v694
        %v696 = vrot.slane %v689, 4
        %v697 = vadd.f32 %v689, %v696
        %v698 = vrot.slane %v697, 2
        %v699 = vadd.f32 %v697, %v698
        %v700 = vrot.slane %v699, 1
        %v701 = vadd.f32 %v699, %v700
        %v702 = vrcp.pop %v695
        %v703 = vmul.f32 %v687, %v702
        %v704 = vrcp.pop %v701
        %v705 = vmul.f32 %v689, %v704
        %v706 = vmul.f32 %v703, %v653
        %v707 = vmul.f32 %v705, %v654
        %v708 = vrot.slane %v706, 4
        %v709 = vadd.f32 %v706, %v708
        %v710 = vrot.slane %v709, 2
        %v711 = vadd.f32 %v709, %v710
        %v712 = vrot.slane %v711, 1
        %v713 = vadd.f32 %v711, %v712
        %v714 = vrot.slane %v707, 4
        %v715 = vadd.f32 %v707, %v714
        %v716 = vrot.slane %v715, 2
        %v717 = vadd.f32 %v715, %v716
        %v718 = vrot.slane %v717, 1
        %v719 = vadd.f32 %v717, %v718
        %v720 = vld [vmem:[#allocation9] sm:$0xff]
        %v721 = vld [vmem:[#allocation9 + $0x8] sm:$0xff]
        %v722 = vld [vmem:[#allocation9 + $0x10] sm:$0xff]
        %v723 = vld [vmem:[#allocation9 + $0x18] sm:$0xff]
        %v724 = vld [vmem:[#allocation9 + $0x20] sm:$0xff]
        %v725 = vld [vmem:[#allocation9 + $0x28] sm:$0xff]
        %v726 = vld [vmem:[#allocation9 + $0x30] sm:$0xff]
        %v727 = vld [vmem:[#allocation9 + $0x38] sm:$0xff]
        %v728 = vld [vmem:[#allocation9 + $0x40] sm:$0xff]
        %v729 = vld [vmem:[#allocation9 + $0x48] sm:$0xff]
        %v730 = vld [vmem:[#allocation9 + $0x50] sm:$0xff]
        %v731 = vld [vmem:[#allocation9 + $0x58] sm:$0xff]
        %v732 = vld [vmem:[#allocation9 + $0x60] sm:$0xff]
        %v733 = vld [vmem:[#allocation9 + $0x68] sm:$0xff]
        %v734 = vld [vmem:[#allocation9 + $0x70] sm:$0xff]
        %v735 = vld [vmem:[#allocation9 + $0x78] sm:$0xff]
        %v736 = vld [vmem:[%s7] sm:$0x1]
        %v738 = vlaneseq
        %v739 = vshrl.u32 %v738, 7
        %v740 = vsub.s32 0, %v739
        %v741 = vrot.slane %v736, %v740
        %vm745 = vcmask 1041409
        %v746 = vsel %vm745, %v719, %v713
        %748 = vmatprep.subr.mxu0 0.0
        %749 = vmatpush1.msra.mxu0 %v720
        %750 = vmatprep.subr.mxu0 0.0
        %751 = vmatpush1.msra.mxu0 %v721
        %752 = vmatprep.subr.mxu0 0.0
        %753 = vmatpush1.msra.mxu0 %v722
        %754 = vmatprep.subr.mxu0 0.0
        %755 = vmatpush1.msra.mxu0 %v723
        %756 = vmatprep.subr.mxu0 0.0
        %757 = vmatpush1.msra.mxu0 %v724
        %758 = vmatprep.subr.mxu0 0.0
        %759 = vmatpush1.msra.mxu0 %v725
        %760 = vmatprep.subr.mxu0 0.0
        %761 = vmatpush1.msra.mxu0 %v726
        %762 = vmatprep.subr.mxu0 0.0
        %763 = vmatpush1.msra.mxu0 %v727
        %764 = vmatprep.subr.mxu0 0.0
        %765 = vmatpush1.msra.mxu0 %v728
        %766 = vmatprep.subr.mxu0 0.0
        %767 = vmatpush1.msra.mxu0 %v729
        %768 = vmatprep.subr.mxu0 0.0
        %769 = vmatpush1.msra.mxu0 %v730
        %770 = vmatprep.subr.mxu0 0.0
        %771 = vmatpush1.msra.mxu0 %v731
        %772 = vmatprep.subr.mxu0 0.0
        %773 = vmatpush1.msra.mxu0 %v732
        %774 = vmatprep.subr.mxu0 0.0
        %775 = vmatpush1.msra.mxu0 %v733
        %776 = vmatprep.subr.mxu0 0.0
        %777 = vmatpush1.msra.mxu0 %v734
        %778 = vmatprep.subr.mxu0 0.0
        %779 = vmatpush1.msra.mxu0 %v735
        %780 = vmatprep.subr.mxu0 0.0
        %781 = vmatpush1.msra.mxu0 0.0
        %782 = vmatprep.subr.mxu0 0.0
        %783 = vmatpush1.msra.mxu0 0.0
        %784 = vmatprep.subr.mxu0 0.0
        %785 = vmatpush1.msra.mxu0 0.0
        %786 = vmatprep.subr.mxu0 0.0
        %787 = vmatpush1.msra.mxu0 0.0
        %788 = vmatprep.subr.mxu0 0.0
        %789 = vmatpush1.msra.mxu0 0.0
        %790 = vmatprep.subr.mxu0 0.0
        %791 = vmatpush1.msra.mxu0 0.0
        %792 = vmatprep.subr.mxu0 0.0
        %793 = vmatpush1.msra.mxu0 0.0
        %794 = vmatprep.subr.mxu0 0.0
        %795 = vmatpush1.msra.mxu0 0.0
        %796 = vmatprep.subr.mxu0 0.0
        %797 = vmatpush1.msra.mxu0 0.0
        %798 = vmatprep.subr.mxu0 0.0
        %799 = vmatpush1.msra.mxu0 0.0
        %800 = vmatprep.subr.mxu0 0.0
        %801 = vmatpush1.msra.mxu0 0.0
        %802 = vmatprep.subr.mxu0 0.0
        %803 = vmatpush1.msra.mxu0 0.0
        %804 = vmatprep.subr.mxu0 0.0
        %805 = vmatpush1.msra.mxu0 0.0
        %806 = vmatprep.subr.mxu0 0.0
        %807 = vmatpush1.msra.mxu0 0.0
        %808 = vmatprep.subr.mxu0 0.0
        %809 = vmatpush1.msra.mxu0 0.0
        %810 = vmatprep.subr.mxu0 0.0
        %811 = vmatpush1.msra.mxu0 0.0
        %812 = vmatprep.mubr.f32.mxu0 0.0
        %813 = vmatmul.mubr.f32.gmra.mrb[0].mxu0 %v746
        %v814 = vpop.f32.mrb[0].mxu0
        %v815 = vadd.f32 %v741, %v814
        %v816 = vpop.f32.mrb[0].mxu0
        %817 = vdwg.mxu0
        %v818 = vmax.f32 %v815, 0.0
        %v819 = vld [vmem:[%s8] sm:$0x1]
        %v821 = vlaneseq
        %v822 = vshrl.u32 %v821, 7
        %v823 = vsub.s32 0, %v822
        %v824 = vrot.slane %v819, %v823
        %v826 = vmul.f32 %v818, %v824
        %vm827 = vcmask 1041408
        %v828 = vsel %vm827, %v826, 0.0
        %829 = vadd.xlane.f32.xlu0 %v828
        %v830 = vpop.xlane.xlu0 %829
        %s831 = sld [smem:[#allocation3]]
        %v832 = vstv %s831
        %v833 = vadd.f32 %v830, %v832
        %v835 = vlaneseq
        %v836 = vshrl.u32 %v835, 7
        %v837 = vsub.s32 0, %v836
        %v838 = vrot.slane %v833, %v837
        %v839 = vlaneseq
        %v840 = vshrl.u32 %v839, 7
        %v841 = vsub.s32 1, %v840
        %v842 = vrot.slane %v833, %v841
        %vm845 = vcmask 0
        %846 = vst.msk [vmem:[%s451] sm:$0x1] %vm845, %v838
        %847 = vst.msk [vmem:[%s451 + $0x1] sm:$0x1] %vm845, %v842
        %s848 = smul.u32 2, %s29
        %p849 = scmp.lt.s32.totalorder %s848, 3
        %s850 = scalar_select %p849, %s848, 3
        %s851 = scalar_lea.vmem %s11, %s850
        // Predicated region
        $region81: #{tpu_custom_call.1} parent=63 // pred_check
          %p852 = pneg %p283
        $region82: #{tpu_custom_call.1} parent=63 // pred_check_branch
          %854 = sbr.rel (%p852) target = $region84
        $region83: #{tpu_custom_call.1} parent=63 // pred_region
          %s855 = smul.u32 2, %s29
        $region84: #{tpu_custom_call.1} parent=63 // pred_fallthru
          _
      $region64: #{tpu_custom_call.1} parent=5 // pred_fallthru
        _
      %p856 = scmp.le.s32.totalorder 2, %s24
      // Predicated region
      $region85: #{tpu_custom_call.1} parent=5 // pred_check
        %p857 = pneg %p856
      $region86: #{tpu_custom_call.1} parent=5 // pred_check_branch
        %859 = sbr.rel (%p857) target = $region88
      $region87: #{tpu_custom_call.1} parent=5 // pred_region
        %s860 = ssub.s32 %s24, 2
        // Predicated region
        $region89: #{tpu_custom_call.1} parent=87 // pred_check
          %p861 = pneg %p289
        $region90: #{tpu_custom_call.1} parent=87 // pred_check_branch
          %863 = sbr.rel (%p861) target = $region92
        $region91: #{tpu_custom_call.1} parent=87 // pred_region
          %s864 = smul.u32 2, %s30
          %p865 = scmp.lt.s32.totalorder %s864, 3
          %s866 = scalar_select %p865, %s864, 3
          %s867 = scalar_lea.vmem %s11, %s866
        $region92: #{tpu_custom_call.1} parent=87 // pred_fallthru
          _
      $region88: #{tpu_custom_call.1} parent=5 // pred_fallthru
        _
    $region6: #{tpu_custom_call.1} parent=1 // loop_footer
      %s28 = sadd.s32 1, %s24
    $region7: #{tpu_custom_call.1} parent=1 // loop_footer_branch
      %23 = sbr.rel target = $region3
    $region8: #{tpu_custom_call.1} parent=1 // loop_exit
      _
    %868 = vsyncpa [#allocation5], 1
    %s869 = scalar_lea.sflag [#allocation5], 1
    %870 = vsyncpa %s869, 1
    %871 = vsyncpa [#allocation7], 1
    %872 = vsyncpa [#allocation10], 1

</llo_original>
